<compile_context>
chip_gen: v7x
topology: tpu7x:2x2x1
jax: 0.10.0
libtpu: 0.0.40
codegen_flags: <defaults>
</compile_context>

<pallas_src>
import functools
import math

import jax
import jax.numpy as jnp
from jax.experimental import pallas as pl
from jax.experimental.pallas import tpu as pltpu

_LANE = 128
_MAX_LANE_WIDTH = 1024          # widest lane-dense slab width we try for
_TARGET_TILE_BYTES = 4 << 20    # ~4 MiB per buffer; double-buffered in + out
                                # ~= 16 MiB, within the explicit 32 MiB limit.
_VMEM_LIMIT_BYTES = 32 << 20    # safe on v5e/v6e (128 MiB phys) and v7x (64 MiB).


def _sublane_multiple(dtype) -> int:
    # f32/i32 -> 8, bf16/f16 -> 16, int8/fp8 -> 32 sublanes per packed vreg.
    itemsize = jnp.dtype(dtype).itemsize
    return max(8, 32 // max(itemsize, 1))


def _round_up(v: int, m: int) -> int:
    return ((v + m - 1) // m) * m


def _scaled_leaky_relu_kernel(x_ref, o_ref, *, pos_scale, neg_scale):
    x = x_ref[...]
    # Select between the two (sqrt(2)-folded) scales, then a single vmul.
    pos = jnp.asarray(pos_scale, dtype=x.dtype)
    neg = jnp.asarray(neg_scale, dtype=x.dtype)
    o_ref[...] = (x * jnp.where(x >= 0, pos, neg)).astype(o_ref.dtype)


def _reference(x, negative_slope=0.2):
    # Pure-jnp expression; also used as the ragged-input fallback.
    return jnp.where(x >= 0, x, x * negative_slope) * math.sqrt(2.0)


def scaled_leaky_relu(x: jax.Array, negative_slope: float = 0.2) -> jax.Array:
    orig_shape = x.shape
    dtype = x.dtype
    n = x.size
    itemsize = jnp.dtype(dtype).itemsize

    pos_scale = math.sqrt(2.0)
    neg_scale = negative_slope * math.sqrt(2.0)

    # ---- ragged inputs: skip pad+slice entirely (it costs 2-3x extra HBM
    # traffic); XLA's fused elementwise loop is already ~HBM roofline. -------
    if n == 0 or n % _LANE != 0:
        return _reference(x, negative_slope).astype(dtype)

    # ---- lane-dense slab: (rows, W) with W a large multiple of 128 ----------
    w = _MAX_LANE_WIDTH
    while n % w != 0:
        w //= 2
    slab = x.reshape(n // w, w)      # free reshape of a contiguous array
    rows = slab.shape[0]

    # ---- dtype-aware sublane tiling, biggest tile within the VMEM budget ----
    sub = _sublane_multiple(dtype)
    budget_rows = max(sub, (_TARGET_TILE_BYTES // (w * itemsize)) // sub * sub)
    if rows <= sub:
        tile_r = rows                # tiny input: one full block
    else:
        # Cap at (rounded-up) half the rows so the parallel grid keeps >= 2
        # near-balanced steps and v7x can shard them across its two TCs.
        tile_r = min(budget_rows, _round_up((rows + 1) // 2, sub))
    grid = (pl.cdiv(rows, tile_r),)  # Pallas clips any ragged last block

    kernel = functools.partial(
        _scaled_leaky_relu_kernel, pos_scale=pos_scale, neg_scale=neg_scale)

    out = pl.pallas_call(
        kernel,
        out_shape=jax.ShapeDtypeStruct((rows, w), dtype),
        grid_spec=pltpu.PrefetchScalarGridSpec(
            num_scalar_prefetch=0,
            grid=grid,
            in_specs=[pl.BlockSpec((tile_r, w), lambda i: (i, 0))],
            out_specs=pl.BlockSpec((tile_r, w), lambda i: (i, 0)),
        ),
        compiler_params=pltpu.CompilerParams(
            dimension_semantics=("parallel",),
            vmem_limit_bytes=_VMEM_LIMIT_BYTES,
        ),
        cost_estimate=pl.CostEstimate(
            flops=2 * n, transcendentals=0, bytes_accessed=2 * n * itemsize),
    )(slab)

    return out.reshape(orig_shape)


if __name__ == "__main__":
    key = jax.random.PRNGKey(0)

    # Primary check: NCHW input matching the PyTorch module's usage.
    x = jax.random.normal(key, (2, 4, 16, 16), dtype=jnp.float32)
    y = jax.block_until_ready(scaled_leaky_relu(x))
    assert y.shape == x.shape and y.dtype == x.dtype
    assert jnp.allclose(y, _reference(x), atol=1e-6, rtol=1e-5)

    # Exercise the multi-step (grid > 1) parallel path.
    k1, k2 = jax.random.split(key)
    x2 = jax.random.normal(k1, (4, 8, 64, 64), dtype=jnp.float32)
    y2 = jax.block_until_ready(scaled_leaky_relu(x2))
    assert y2.shape == x2.shape and y2.dtype == x2.dtype
    assert jnp.allclose(y2, _reference(x2), atol=1e-6, rtol=1e-5)

    # Ragged (n % 128 != 0) input now takes the pure-jnp fallback (no pad+slice).
    x3 = jax.random.normal(k2, (2, 3, 7, 5), dtype=jnp.float32)
    y3 = jax.block_until_ready(scaled_leaky_relu(x3))
    assert y3.shape == x3.shape and y3.dtype == x3.dtype
    assert jnp.allclose(y3, _reference(x3), atol=1e-6, rtol=1e-5)

    # bf16 path (16-sublane tiling).
    x4 = jax.random.normal(key, (2, 4, 16, 16), dtype=jnp.bfloat16)
    y4 = jax.block_until_ready(scaled_leaky_relu(x4))
    assert y4.shape == x4.shape and y4.dtype == x4.dtype
    assert jnp.allclose(y4.astype(jnp.float32),
                        _reference(x4).astype(jnp.float32),
                        atol=2e-2, rtol=2e-2)

    print("KERNEL_OK")
</pallas_src>

<mosaic_0001>
module attributes {stable_mosaic.version = 11 : i64} {
  func.func @_scaled_leaky_relu_kernel(%arg0: i32, %arg1: memref<2x1024xf32, #tpu.memory_space<vmem>>, %arg2: memref<2x1024xf32, #tpu.memory_space<vmem>>) attributes {dimension_semantics = [#tpu.dimension_semantics<parallel>], iteration_bounds = array<i64: 1>, scalar_prefetch = 0 : i64, scratch_operands = 0 : i64, tpu.core_type = #tpu.core_type<tc>, window_params = [{transform_indices = @transform_0, window_bounds = array<i64: 2, 1024>}, {transform_indices = @transform_1, window_bounds = array<i64: 2, 1024>}]} {
    %c0 = arith.constant 0 : index
    %c0_0 = arith.constant 0 : index
    %0 = vector.load %arg1[%c0, %c0_0] : memref<2x1024xf32, #tpu.memory_space<vmem>>, vector<2x1024xf32>
    %cst = arith.constant 0.000000e+00 : f32
    %1 = vector.broadcast %cst : f32 to vector<2x1024xf32>
    %2 = arith.cmpf oge, %0, %1 : vector<2x1024xf32>
    %cst_1 = arith.constant 1.41421354 : f32
    %cst_2 = arith.constant 0.282842726 : f32
    %3 = vector.broadcast %cst_1 : f32 to vector<2x1024xf32>
    %4 = vector.broadcast %cst_2 : f32 to vector<2x1024xf32>
    %5 = arith.select %2, %3, %4 : vector<2x1024xi1>, vector<2x1024xf32>
    %6 = arith.mulf %0, %5 : vector<2x1024xf32>
    %c0_3 = arith.constant 0 : index
    %c0_4 = arith.constant 0 : index
    %7 = vector.load %arg2[%c0_3, %c0_4] : memref<2x1024xf32, #tpu.memory_space<vmem>>, vector<2x1024xf32>
    tpu.vector_store %arg2[%c0_3, %c0_4], %6 {strides = array<i32>} : memref<2x1024xf32, #tpu.memory_space<vmem>>, vector<2x1024xf32>,
    return
  }
  func.func @transform_0(%arg0: i32) -> (i32, i32) {
    %c0_i32 = arith.constant 0 : i32
    %c0_i32_0 = arith.constant 0 : i32
    return %arg0, %c0_i32 : i32, i32
  }
  func.func @transform_1(%arg0: i32) -> (i32, i32) {
    %c0_i32 = arith.constant 0 : i32
    %c0_i32_0 = arith.constant 0 : i32
    return %arg0, %c0_i32 : i32, i32
  }
}

</mosaic_0001>

<llo_original>
// kernel: tpu_custom_call.1
$region0: #{tpu_custom_call.1}
  #allocation0 [shape = 'u32[]', space=smem, size = 0x4, offset = 0x4, fixed_abs, tag = 'smem constant byte address 0x4 - core index']
  #allocation1 [shape = 'u32[144,128]{1,0:T(1,128)}', space=vmem, size = 0x12000, scoped, tag = 'internal scratch']
  %s0 = inlined_call_operand.hbm [shape: f32[2,1024], index: 0, kind: input, shape index: {}]
  %s1 = inlined_call_operand.hbm [shape: f32[2,1024], index: 1, kind: output, shape index: {}]
  %s2 = sld [smem:[#allocation0]]
  $region18: #{tpu_custom_call.1} parent=0
    _
  %s4 = ssub.s32 1, %s2
  %s5 = scalar_select 0, %s4, %s2
  $region1: #{tpu_custom_call.1} parent=0
    #allocation2 [shape = 'u8[8192]{0}', space=vmem, size = 0x2000, scoped, tag = 'input window, operand 0, single buffered']
    #allocation3 [shape = 's32[1]{0}', space=sflag, size = 0x4, scoped, tag = 'scoped memory for tpu_custom_call.1']
    #allocation4 [shape = 's32[1]{0}', space=sflag, size = 0x4, scoped, tag = 'scoped memory for tpu_custom_call.1']
    #allocation5 [shape = 'u8[8192]{0}', space=vmem, size = 0x2000, scoped, tag = 'output window, operand 0, single buffered']
    %6 = vsyncpa [#allocation3], 0
    %7 = vsyncpa [#allocation4], 0
    // Predicated region
    $region2: #{tpu_custom_call.1} parent=1 // pred_check
      _
    $region3: #{tpu_custom_call.1} parent=1 // pred_check_branch
      %9 = sbr.rel (0) target = $region5
    $region4: #{tpu_custom_call.1} parent=1 // pred_region
      %s11 = ssub.s32 256, 256
      %12 = vsyncadd [#allocation3], %s11
      %s14 = sshll.u32 [#allocation2], 4
      %s15 = int_to_ptr.vmem [resolvable:$true] %s14
      %17 = dma.hbm_to_vmem [thread:$0]  %s0, 256, %s15, [#allocation3]
    $region5: #{tpu_custom_call.1} parent=1 // pred_fallthru
      _
    // Predicated region
    $region6: #{tpu_custom_call.1} parent=1 // pred_check
      _
    $region7: #{tpu_custom_call.1} parent=1 // pred_check_branch
      %19 = sbr.rel (0) target = $region9
    $region8: #{tpu_custom_call.1} parent=1 // pred_region
      %20 = dma.done [#allocation3], 256
    $region9: #{tpu_custom_call.1} parent=1 // pred_fallthru
      _
    %v21 = vld [vmem:[#allocation2] sm:$0xff]
    %v22 = vld [vmem:[#allocation2 + $0x8] sm:$0xff]
    %vm23 = vcmp.ge.f32.partialorder %v21, 0.0
    %vm24 = vcmp.ge.f32.partialorder %v22, 0.0
    %v25 = vsel %vm23, 1.4142135, 0.28284273
    %v26 = vsel %vm24, 1.4142135, 0.28284273
    %v27 = vmul.f32 %v21, %v25
    %v28 = vmul.f32 %v22, %v26
    %29 = vst [vmem:[#allocation5] sm:$0xff] %v27
    %30 = vst [vmem:[#allocation5 + $0x8] sm:$0xff] %v28
    // Predicated region
    $region10: #{tpu_custom_call.1} parent=1 // pred_check
      _
    $region11: #{tpu_custom_call.1} parent=1 // pred_check_branch
      %32 = sbr.rel (0) target = $region13
    $region12: #{tpu_custom_call.1} parent=1 // pred_region
      %s34 = ssub.s32 256, 256
      %35 = vsyncadd [#allocation4], %s34
      %s37 = sshll.u32 [#allocation5], 4
      %s38 = int_to_ptr.vmem [resolvable:$true] %s37
      %40 = dma.vmem_to_hbm [thread:$0]  %s38, 256, %s1, [#allocation4]
    $region13: #{tpu_custom_call.1} parent=1 // pred_fallthru
      _
    // Predicated region
    $region14: #{tpu_custom_call.1} parent=1 // pred_check
      _
    $region15: #{tpu_custom_call.1} parent=1 // pred_check_branch
      %42 = sbr.rel (0) target = $region17
    $region16: #{tpu_custom_call.1} parent=1 // pred_region
      %43 = dma.done [#allocation4], 256
    $region17: #{tpu_custom_call.1} parent=1 // pred_fallthru
      _
    %44 = vsyncpa [#allocation3], 1
    %45 = vsyncpa [#allocation4], 1

</llo_original>
